<compile_context>
chip_gen: v5e
topology: v5e:2x2
jax: 0.10.0
libtpu: 0.0.40
codegen_flags: <defaults>
</compile_context>

<pallas_src>
import jax
import jax.numpy as jnp
from jax import lax
from jax.experimental import pallas as pl
from jax.experimental.pallas import tpu as pltpu


_EPS = 1e-12  # F.normalize default eps


def _make_kernel(use_bf16_matmul):
    mm_dtype = jnp.bfloat16 if use_bf16_matmul else jnp.float32

    def kernel(scale_ref, q_ref, kt_ref, svg_ref, out_ref, acc_ref):
        j = pl.program_id(2)          # M-tile (reduction) axis: last, "arbitrary"

        @pl.when(j == 0)
        def _init():
            acc_ref[...] = jnp.zeros_like(acc_ref)

        scale = scale_ref[0]          # SMEM scalar (no recompile when scale changes)
        q = q_ref[...]                # (tn, D) f32
        kt = kt_ref[...]              # (D, tm) f32

        # L2 normalize along the feature dim: x / max(||x||, eps) via clamped rsqrt.
        q_inv = jnp.minimum(lax.rsqrt(jnp.sum(q * q, axis=1, keepdims=True)), 1.0 / _EPS)
        k_inv = jnp.minimum(lax.rsqrt(jnp.sum(kt * kt, axis=0, keepdims=True)), 1.0 / _EPS)
        qn = (q * q_inv).astype(mm_dtype)
        ktn = (kt * k_inv).astype(mm_dtype)

        # attn_logits tile = qn @ ktn  -> (tn, tm), f32 accumulation on the MXU.
        attn_logits = jnp.dot(qn, ktn, preferred_element_type=jnp.float32)

        # attn_weights = exp(-(alpha - alpha*logits)) = exp(alpha*(logits - 1)).
        # TODO(synk): at large N*M the single EUP slot (exp) binds on v6e/v7x;
        # evaluate the exp on bf16 inputs there if it becomes the roofline.
        attn_weights = jnp.exp(scale * (attn_logits - 1.0))

        # Accumulate this M-tile's contribution: (tn, tm) @ (tm, C).
        acc_ref[...] += jnp.dot(attn_weights.astype(mm_dtype),
                                svg_ref[...].astype(mm_dtype),
                                preferred_element_type=jnp.float32)

        @pl.when(j == pl.num_programs(2) - 1)
        def _finalize():
            # TODO(synk): C << 128 means masked vst on the final store; for peak
            # store bandwidth pack the episode axis into lanes / pad C to 128.
            out_ref[...] = acc_ref[...].astype(out_ref.dtype)

    return kernel


def _round_up(x, m):
    return ((x + m - 1) // m) * m


def _pick_tile(dim, max_tile, align):
    """Full-extent tile if it fits, else an `align`-multiple; returns (tile, padded_dim)."""
    if dim <= max_tile:
        return dim, dim
    tile = max(align, (max_tile // align) * align)
    return tile, _round_up(dim, tile)


def sdpa_forward_batched(query, support_key, class_proxies, support_class, scale,
                         *, tn_max=256, tm_max=512, use_bf16_matmul=False):
    """Batched episodes: query (B,N,D), support_key (B,M,D) -> logits (B,N,C).

    class_proxies (C,D) and support_class (M,) are module parameters shared
    across episodes.  Precondition: support_class values lie in [0, C)
    (JAX clamps out-of-range indices instead of raising like PyTorch).
    """
    B, N, D = query.shape
    _, M, _ = support_key.shape
    C, _ = class_proxies.shape

    query = query.astype(jnp.float32)
    support_key = support_key.astype(jnp.float32)
    class_proxies = class_proxies.astype(jnp.float32)

    # Hoisted gather + Gram:  sv_gram = class_proxies[support_class] @ class_proxies.T
    gram = jnp.dot(class_proxies, class_proxies.T)               # (C, C)
    sv_gram = jnp.take(gram, support_class.astype(jnp.int32), axis=0)  # (M, C)

    # Pre-transpose keys so the in-kernel contraction is (tn,D)@(D,tm).
    key_t = jnp.swapaxes(support_key, -1, -2)                    # (B, D, M)

    # Tile selection + zero padding (padded key columns meet zero sv_gram rows).
    tn, n_pad = _pick_tile(N, tn_max, 8)
    tm, m_pad = _pick_tile(M, tm_max, 128)
    if n_pad != N:
        query = jnp.pad(query, ((0, 0), (0, n_pad - N), (0, 0)))
    if m_pad != M:
        key_t = jnp.pad(key_t, ((0, 0), (0, 0), (0, m_pad - M)))
        sv_gram = jnp.pad(sv_gram, ((0, m_pad - M), (0, 0)))

    grid = (B, n_pad // tn, m_pad // tm)
    scale_arr = jnp.asarray(scale, dtype=jnp.float32).reshape(1)

    # Generation-aware VMEM budget: double-buffered input/output tiles + logits
    # tile + accumulator with headroom, capped under v7x's 64 MiB physical VMEM.
    tile_bytes = 4 * (2 * tn * D + 2 * D * tm + 2 * tm * C + 3 * tn * C + 4 * tn * tm)
    vmem_limit = int(min(max(2 * tile_bytes, 32 * 1024 * 1024), 48 * 1024 * 1024))

    cost = pl.CostEstimate(
        flops=int(B * (2 * n_pad * m_pad * D + 2 * n_pad * m_pad * C
                       + 3 * (n_pad * D + m_pad * D))),
        transcendentals=int(B * n_pad * m_pad),
        bytes_accessed=int(4 * (B * (n_pad * D + D * m_pad + n_pad * C) + m_pad * C)),
    )

    out = pl.pallas_call(
        _make_kernel(use_bf16_matmul),
        out_shape=jax.ShapeDtypeStruct((B, n_pad, C), jnp.float32),
        grid=grid,
        in_specs=[
            pl.BlockSpec(memory_space=pltpu.MemorySpace.SMEM),            # scale (1,)
            pl.BlockSpec((None, tn, D), lambda b, i, j: (b, i, 0)),       # query
            pl.BlockSpec((None, D, tm), lambda b, i, j: (b, 0, j)),       # key_t
            pl.BlockSpec((tm, C), lambda b, i, j: (j, 0)),                # sv_gram
        ],
        out_specs=pl.BlockSpec((None, tn, C), lambda b, i, j: (b, i, 0)),
        scratch_shapes=[pltpu.VMEM((tn, C), jnp.float32)],
        compiler_params=pltpu.CompilerParams(
            dimension_semantics=("parallel", "parallel", "arbitrary"),
            vmem_limit_bytes=vmem_limit,
        ),
        cost_estimate=cost,
    )(scale_arr, query, key_t, sv_gram)

    return out[:, :N, :]


def sdpa_forward(query, support_key, class_proxies, support_class, scale, **kw):
    """Single-episode SdpaModule.forward: query (N,D), support_key (M,D) -> (N,C)."""
    return sdpa_forward_batched(query[None], support_key[None], class_proxies,
                                support_class, scale, **kw)[0]


def sdpa_reference(query, support_key, class_proxies, support_class, scale):
    """Pure-JAX reference mirroring the PyTorch module."""
    q = query / jnp.maximum(jnp.linalg.norm(query, axis=1, keepdims=True), _EPS)
    k = support_key / jnp.maximum(
        jnp.linalg.norm(support_key, axis=1, keepdims=True), _EPS)
    attn_logits = q @ k.T
    attn_weights = jnp.exp(-(scale - scale * attn_logits))
    sv = class_proxies[support_class]
    return (attn_weights @ sv) @ class_proxies.T


if __name__ == "__main__":
    key = jax.random.PRNGKey(0)
    k1, k2, k3, k4, k5, k6, k7 = jax.random.split(key, 7)

    # --- Single-episode shapes consistent with the module. ---
    N, M, D, C = 8, 16, 32, 8   # queries, support set size, feature dim, classes
    scale = 10.0

    query = jax.random.normal(k1, (N, D), dtype=jnp.float32)
    support_key = jax.random.normal(k2, (M, D), dtype=jnp.float32)
    class_proxies = jax.random.normal(k3, (C, D), dtype=jnp.float32) * 0.1
    support_class = jax.random.randint(k4, (M,), 0, C, dtype=jnp.int32)

    out = sdpa_forward(query, support_key, class_proxies, support_class, scale)
    out = jax.block_until_ready(out)
    ref = sdpa_reference(query, support_key, class_proxies, support_class, scale)
    assert out.shape == (N, C)
    assert jnp.allclose(out, ref, atol=1e-4, rtol=1e-4), "single-episode mismatch"

    # --- Batched episodes + tiled (padded) N/M reduction path. ---
    B, N2, M2 = 2, 24, 272
    q_b = jax.random.normal(k5, (B, N2, D), dtype=jnp.float32)
    sk_b = jax.random.normal(k6, (B, M2, D), dtype=jnp.float32)
    sc2 = jax.random.randint(k7, (M2,), 0, C, dtype=jnp.int32)

    out_b = sdpa_forward_batched(q_b, sk_b, class_proxies, sc2, scale,
                                 tn_max=16, tm_max=128)
    out_b = jax.block_until_ready(out_b)
    ref_b = jnp.stack([sdpa_reference(q_b[b], sk_b[b], class_proxies, sc2, scale)
                       for b in range(B)])
    assert out_b.shape == (B, N2, C)
    assert jnp.allclose(out_b, ref_b, atol=1e-4, rtol=1e-4), "batched/tiled mismatch"

    print("KERNEL_OK")
</pallas_src>

<mosaic_0001>
module attributes {stable_mosaic.version = 11 : i64} {
  func.func @kernel(%arg0: i32, %arg1: i32, %arg2: i32, %arg3: memref<1xf32, #tpu.memory_space<smem>>, %arg4: memref<1x8x32xf32, #tpu.memory_space<vmem>>, %arg5: memref<1x32x16xf32, #tpu.memory_space<vmem>>, %arg6: memref<16x8xf32, #tpu.memory_space<vmem>>, %arg7: memref<1x8x8xf32, #tpu.memory_space<vmem>>, %arg8: memref<8x8xf32, #tpu.memory_space<vmem>>) attributes {dimension_semantics = [#tpu.dimension_semantics<parallel>, #tpu.dimension_semantics<parallel>, #tpu.dimension_semantics<arbitrary>], iteration_bounds = array<i64: 1, 1, 1>, scalar_prefetch = 0 : i64, scratch_operands = 1 : i64, tpu.core_type = #tpu.core_type<tc>, window_params = [{transform_indices = @transform_0, window_bounds = array<i64: 1>}, {transform_indices = @transform_1, window_bounds = array<i64: 1, 8, 32>}, {transform_indices = @transform_2, window_bounds = array<i64: 1, 32, 16>}, {transform_indices = @transform_3, window_bounds = array<i64: 16, 8>}, {transform_indices = @transform_4, window_bounds = array<i64: 1, 8, 8>}]} {
    %c0_i32 = arith.constant 0 : i32
    %0 = arith.cmpi eq, %arg2, %c0_i32 : i32
    %1 = arith.extui %0 : i1 to i32
    %c0_i32_0 = arith.constant 0 : i32
    %2 = arith.cmpi ne, %1, %c0_i32_0 : i32
    scf.if %2 {
      %cst_21 = arith.constant 0.000000e+00 : f32
      %38 = vector.broadcast %cst_21 : f32 to vector<8x8xf32>
      %c0_22 = arith.constant 0 : index
      %c0_23 = arith.constant 0 : index
      %39 = vector.load %arg8[%c0_22, %c0_23] : memref<8x8xf32, #tpu.memory_space<vmem>>, vector<8x8xf32>
      tpu.vector_store %arg8[%c0_22, %c0_23], %38 {strides = array<i32>} : memref<8x8xf32, #tpu.memory_space<vmem>>, vector<8x8xf32>,
    } else {
    }
    %c0 = arith.constant 0 : index
    %3 = memref.load %arg3[%c0] : memref<1xf32, #tpu.memory_space<smem>>
    %c0_1 = arith.constant 0 : index
    %c0_2 = arith.constant 0 : index
    %c0_3 = arith.constant 0 : index
    %4 = vector.load %arg4[%c0_1, %c0_2, %c0_3] : memref<1x8x32xf32, #tpu.memory_space<vmem>>, vector<1x8x32xf32>
    %5 = vector.shape_cast %4 : vector<1x8x32xf32> to vector<8x32xf32>
    %c0_4 = arith.constant 0 : index
    %c0_5 = arith.constant 0 : index
    %c0_6 = arith.constant 0 : index
    %6 = vector.load %arg5[%c0_4, %c0_5, %c0_6] : memref<1x32x16xf32, #tpu.memory_space<vmem>>, vector<1x32x16xf32>
    %7 = vector.shape_cast %6 : vector<1x32x16xf32> to vector<32x16xf32>
    %8 = arith.mulf %5, %5 : vector<8x32xf32>
    %cst = arith.constant dense<0.000000e+00> : vector<8xf32>
    %9 = vector.multi_reduction <add>, %8, %cst [1] : vector<8x32xf32> to vector<8xf32>
    %10 = vector.shape_cast %9 : vector<8xf32> to vector<8x1xf32>
    %11 = math.rsqrt %10 : vector<8x1xf32>
    %cst_7 = arith.constant 9.99999995E+11 : f32
    %12 = vector.broadcast %cst_7 : f32 to vector<8x1xf32>
    %13 = arith.minimumf %11, %12 : vector<8x1xf32>
    %14 = arith.mulf %7, %7 : vector<32x16xf32>
    %cst_8 = arith.constant dense<0.000000e+00> : vector<16xf32>
    %15 = vector.multi_reduction <add>, %14, %cst_8 [0] : vector<32x16xf32> to vector<16xf32>
    %16 = vector.shape_cast %15 : vector<16xf32> to vector<1x16xf32>
    %17 = math.rsqrt %16 : vector<1x16xf32>
    %cst_9 = arith.constant 9.99999995E+11 : f32
    %18 = vector.broadcast %cst_9 : f32 to vector<1x16xf32>
    %19 = arith.minimumf %17, %18 : vector<1x16xf32>
    %20 = vector.broadcast %13 : vector<8x1xf32> to vector<8x32xf32>
    %21 = arith.mulf %5, %20 : vector<8x32xf32>
    %22 = vector.broadcast %19 : vector<1x16xf32> to vector<32x16xf32>
    %23 = arith.mulf %7, %22 : vector<32x16xf32>
    %cst_10 = arith.constant dense<0.000000e+00> : vector<8x16xf32>
    %24 = tpu.matmul %21, %23, %cst_10 {dimension_numbers = #tpu.dot_dimension_numbers<[1], [0], [0], [1], [0, 0, 1, 1], [], []>} : vector<8x32xf32>, vector<32x16xf32>, vector<8x16xf32> -> vector<8x16xf32>
    %cst_11 = arith.constant 1.000000e+00 : f32
    %25 = vector.broadcast %cst_11 : f32 to vector<8x16xf32>
    %26 = arith.subf %24, %25 : vector<8x16xf32>
    %27 = vector.broadcast %3 : f32 to vector<8x16xf32>
    %28 = arith.mulf %27, %26 : vector<8x16xf32>
    %29 = math.exp %28 : vector<8x16xf32>
    %c0_12 = arith.constant 0 : index
    %c0_13 = arith.constant 0 : index
    %30 = vector.load %arg8[%c0_12, %c0_13] : memref<8x8xf32, #tpu.memory_space<vmem>>, vector<8x8xf32>
    %c0_14 = arith.constant 0 : index
    %c0_15 = arith.constant 0 : index
    %31 = vector.load %arg6[%c0_14, %c0_15] : memref<16x8xf32, #tpu.memory_space<vmem>>, vector<16x8xf32>
    %cst_16 = arith.constant dense<0.000000e+00> : vector<8x8xf32>
    %32 = tpu.matmul %29, %31, %cst_16 {dimension_numbers = #tpu.dot_dimension_numbers<[1], [0], [0], [1], [0, 0, 1, 1], [], []>} : vector<8x16xf32>, vector<16x8xf32>, vector<8x8xf32> -> vector<8x8xf32>
    %33 = arith.addf %30, %32 : vector<8x8xf32>
    %c0_17 = arith.constant 0 : index
    %c0_18 = arith.constant 0 : index
    %34 = vector.load %arg8[%c0_17, %c0_18] : memref<8x8xf32, #tpu.memory_space<vmem>>, vector<8x8xf32>
    tpu.vector_store %arg8[%c0_17, %c0_18], %33 {strides = array<i32>} : memref<8x8xf32, #tpu.memory_space<vmem>>, vector<8x8xf32>,
    %c0_i32_19 = arith.constant 0 : i32
    %35 = arith.cmpi eq, %arg2, %c0_i32_19 : i32
    %36 = arith.extui %35 : i1 to i32
    %c0_i32_20 = arith.constant 0 : i32
    %37 = arith.cmpi ne, %36, %c0_i32_20 : i32
    scf.if %37 {
      %c0_21 = arith.constant 0 : index
      %c0_22 = arith.constant 0 : index
      %38 = vector.load %arg8[%c0_21, %c0_22] : memref<8x8xf32, #tpu.memory_space<vmem>>, vector<8x8xf32>
      %c0_23 = arith.constant 0 : index
      %c0_24 = arith.constant 0 : index
      %c0_25 = arith.constant 0 : index
      %39 = vector.load %arg7[%c0_23, %c0_24, %c0_25] : memref<1x8x8xf32, #tpu.memory_space<vmem>>, vector<1x8x8xf32>
      %40 = vector.shape_cast %39 : vector<1x8x8xf32> to vector<8x8xf32>
      %41 = vector.shape_cast %38 : vector<8x8xf32> to vector<1x8x8xf32>
      tpu.vector_store %arg7[%c0_23, %c0_24, %c0_25], %41 {strides = array<i32>} : memref<1x8x8xf32, #tpu.memory_space<vmem>>, vector<1x8x8xf32>,
    } else {
    }
    return
  }
  func.func @transform_0(%arg0: i32, %arg1: i32, %arg2: i32) -> i32 {
    %c0_i32 = arith.constant 0 : i32
    %c0_i32_0 = arith.constant 0 : i32
    return %c0_i32 : i32
  }
  func.func @transform_1(%arg0: i32, %arg1: i32, %arg2: i32) -> (i32, i32, i32) {
    %c0_i32 = arith.constant 0 : i32
    %c0_i32_0 = arith.constant 0 : i32
    return %arg0, %arg1, %c0_i32 : i32, i32, i32
  }
  func.func @transform_2(%arg0: i32, %arg1: i32, %arg2: i32) -> (i32, i32, i32) {
    %c0_i32 = arith.constant 0 : i32
    %c0_i32_0 = arith.constant 0 : i32
    return %arg0, %c0_i32, %arg2 : i32, i32, i32
  }
  func.func @transform_3(%arg0: i32, %arg1: i32, %arg2: i32) -> (i32, i32) {
    %c0_i32 = arith.constant 0 : i32
    %c0_i32_0 = arith.constant 0 : i32
    return %arg2, %c0_i32 : i32, i32
  }
  func.func @transform_4(%arg0: i32, %arg1: i32, %arg2: i32) -> (i32, i32, i32) {
    %c0_i32 = arith.constant 0 : i32
    %c0_i32_0 = arith.constant 0 : i32
    return %arg0, %arg1, %c0_i32 : i32, i32, i32
  }
}

</mosaic_0001>

<llo_original>
// kernel: tpu_custom_call.1
$region0: #{tpu_custom_call.1}
  #allocation0 [shape = 'u32[]', space=smem, size = 0x4, offset = 0x4, fixed_abs, tag = 'smem constant byte address 0x4 - core index']
  #allocation1 [shape = 'u32[72,128]{1,0:T(1,128)}', space=vmem, size = 0x9000, scoped, tag = 'internal scratch']
  #allocation2 [shape = 'f32[8,8]{1,0:T(8,128)}', space=vmem, size = 0x1000, scoped, tag = 'scratch operand']
  #allocation3 [shape = 'f32[1]{0:T(128)S(6)}', space=smem, size = 0x200, scoped, tag = 'scoped memory for tpu_custom_call.1']
  %s0 = inlined_call_operand.<no memory space> [shape: f32[1], index: 0, kind: input, shape index: {}]
  %s1 = inlined_call_operand.vmem [shape: f32[1,8,32], index: 1, kind: input, shape index: {}]
  %s2 = inlined_call_operand.vmem [shape: f32[1,32,16], index: 2, kind: input, shape index: {}]
  %s3 = inlined_call_operand.vmem [shape: f32[16,8], index: 3, kind: input, shape index: {}]
  %s4 = inlined_call_operand.hbm [shape: f32[1,8,8], index: 4, kind: output, shape index: {}]
  %s5 = sld [smem:[#allocation0]]
  $region34: #{tpu_custom_call.1} parent=0
    _
  %s7 = ssub.s32 1, %s5
  %s8 = scalar_select 0, %s7, %s5
  %9 = sst [smem:[#allocation3]] %s0
  $region1: #{tpu_custom_call.1} parent=0
    #allocation4 [shape = 'u8[4096]{0}', space=vmem, size = 0x1000, scoped, tag = 'output window, operand 0, single buffered']
    #allocation5 [shape = 's32[1]{0}', space=sflag, size = 0x4, scoped, tag = 'scoped memory for tpu_custom_call.1']
    %10 = vsyncpa [#allocation5], 0
    // Predicated region
    $region2: #{tpu_custom_call.1} parent=1 // pred_check
      _
    $region3: #{tpu_custom_call.1} parent=1 // pred_check_branch
      %12 = sbr.rel (0) target = $region5
    $region4: #{tpu_custom_call.1} parent=1 // pred_region
      _
    $region5: #{tpu_custom_call.1} parent=1 // pred_fallthru
      _
    // Predicated region
    $region6: #{tpu_custom_call.1} parent=1 // pred_check
      _
    $region7: #{tpu_custom_call.1} parent=1 // pred_check_branch
      %14 = sbr.rel (0) target = $region9
    $region8: #{tpu_custom_call.1} parent=1 // pred_region
      _
    $region9: #{tpu_custom_call.1} parent=1 // pred_fallthru
      _
    // Predicated region
    $region10: #{tpu_custom_call.1} parent=1 // pred_check
      _
    $region11: #{tpu_custom_call.1} parent=1 // pred_check_branch
      %16 = sbr.rel (0) target = $region13
    $region12: #{tpu_custom_call.1} parent=1 // pred_region
      _
    $region13: #{tpu_custom_call.1} parent=1 // pred_fallthru
      _
    // Predicated region
    $region14: #{tpu_custom_call.1} parent=1 // pred_check
      _
    $region15: #{tpu_custom_call.1} parent=1 // pred_check_branch
      %18 = sbr.rel (0) target = $region17
    $region16: #{tpu_custom_call.1} parent=1 // pred_region
      _
    $region17: #{tpu_custom_call.1} parent=1 // pred_fallthru
      _
    %p19 = scmp.eq.s32.totalorder 0, 0
    // Predicated region
    $region18: #{tpu_custom_call.1} parent=1 // pred_check
      %p20 = pneg %p19
    $region19: #{tpu_custom_call.1} parent=1 // pred_check_branch
      %22 = sbr.rel (%p20) target = $region21
    $region20: #{tpu_custom_call.1} parent=1 // pred_region
      %vm23 = vcmask 64512
      %24 = vst.msk [vmem:[#allocation2] sm:$0xff] %vm23, 0.0
    $region21: #{tpu_custom_call.1} parent=1 // pred_fallthru
      _
    %s25 = sld [smem:[#allocation3]]
    %v26 = vld [vmem:[%s1] sm:$0xff]
    %v27 = vld [vmem:[%s2] sm:$0xff]
    %v28 = vld [vmem:[%s2 + $0x8] sm:$0xff]
    %v29 = vld [vmem:[%s2 + $0x10] sm:$0xff]
    %v30 = vld [vmem:[%s2 + $0x18] sm:$0xff]
    %v31 = vmul.f32 %v26, %v26
    %vm32 = vcmask 261120
    %v33 = vsel %vm32, %v31, 0.0
    %34 = vadd.xlane.f32.xlu0 %v33
    %v35 = vpop.xlane.xlu0 %34
    %v36 = vrsqrt.pop %v35
    %v37 = vmul.f32 %v36, %v35
    %v38 = vmul.f32 %v37, %v36
    %v39 = vmul.f32 0.5, %v38
    %v40 = vsub.f32 1.5, %v39
    %v41 = vmul.f32 %v36, %v40
    %vm42 = vweird.f32 %v35
    %vm43 = vweird.f32 %v36
    %vm44 = vmor %vm42, %vm43
    %v45 = vsel %vm44, %v36, %v41
    %v46 = vmin.f32 %v45, 1e+12
    %v47 = vmul.f32 %v27, %v27
    %v48 = vmul.f32 %v28, %v28
    %v49 = vmul.f32 %v29, %v29
    %v50 = vmul.f32 %v30, %v30
    %vm51 = vcmask 130048
    %v52 = vsel %vm51, %v47, 0.0
    %v53 = vsel %vm51, %v48, 0.0
    %v54 = vadd.f32 %v52, %v53
    %v55 = vsel %vm51, %v49, 0.0
    %v56 = vadd.f32 %v54, %v55
    %v57 = vsel %vm51, %v50, 0.0
    %v58 = vadd.f32 %v56, %v57
    %v59 = vrot.slane %v58, 4
    %v60 = vadd.f32 %v58, %v59
    %v61 = vrot.slane %v60, 2
    %v62 = vadd.f32 %v60, %v61
    %v63 = vrot.slane %v62, 1
    %v64 = vadd.f32 %v62, %v63
    %v65 = vrsqrt.pop %v64
    %v66 = vmul.f32 %v65, %v64
    %v67 = vmul.f32 %v66, %v65
    %v68 = vmul.f32 0.5, %v67
    %v69 = vsub.f32 1.5, %v68
    %v70 = vmul.f32 %v65, %v69
    %vm71 = vweird.f32 %v64
    %vm72 = vweird.f32 %v65
    %vm73 = vmor %vm71, %vm72
    %v74 = vsel %vm73, %v65, %v70
    %v75 = vmin.f32 %v74, 1e+12
    %v76 = vmul.f32 %v26, %v46
    %v77 = vmul.f32 %v27, %v75
    %v78 = vmul.f32 %v28, %v75
    %v79 = vmul.f32 %v29, %v75
    %v80 = vmul.f32 %v30, %v75
    %v82 = vsel %vm32, %v76, 0
    %84 = vmatpush.msra.mxu0 0.0
    %85 = vmatpush.msra.mxu0 0.0
    %86 = vmatpush.msra.mxu0 0.0
    %87 = vmatpush.msra.mxu0 0.0
    %88 = vmatpush.msra.mxu0 0.0
    %89 = vmatpush.msra.mxu0 0.0
    %90 = vmatpush.msra.mxu0 0.0
    %91 = vmatpush.msra.mxu0 0.0
    %92 = vmatpush.msra.mxu0 0.0
    %93 = vmatpush.msra.mxu0 0.0
    %94 = vmatpush.msra.mxu0 0.0
    %95 = vmatpush.msra.mxu0 0.0
    %96 = vmatpush.msra.mxu0 %v80
    %97 = vmatpush.msra.mxu0 %v79
    %98 = vmatpush.msra.mxu0 %v78
    %99 = vmatpush.msra.mxu0 %v77
    %100 = vmatmul.f32.gmra.mxu0 %v82
    %v101 = vpop.f32.mrf.mxu0
    %v102 = vadd.f32 0.0, %v101
    %103 = vdwg.mxu0
    %v104 = vsub.f32 %v102, 1.0
    %v105 = vstv %s25
    %v106 = vmul.f32 %v105, %v104
    %v107 = vmul.f32 %v106, 1.442695
    %v108 = vpow.pop %v107
    %v109 = vld [vmem:[#allocation2] sm:$0xff]
    %v110 = vld [vmem:[%s3] sm:$0xff]
    %v111 = vld [vmem:[%s3 + $0x8] sm:$0xff]
    %v113 = vsel %vm51, %v108, 0
    %115 = vmatpush.msra.mxu0 0.0
    %116 = vmatpush.msra.mxu0 0.0
    %117 = vmatpush.msra.mxu0 0.0
    %118 = vmatpush.msra.mxu0 0.0
    %119 = vmatpush.msra.mxu0 0.0
    %120 = vmatpush.msra.mxu0 0.0
    %121 = vmatpush.msra.mxu0 0.0
    %122 = vmatpush.msra.mxu0 0.0
    %123 = vmatpush.msra.mxu0 0.0
    %124 = vmatpush.msra.mxu0 0.0
    %125 = vmatpush.msra.mxu0 0.0
    %126 = vmatpush.msra.mxu0 0.0
    %127 = vmatpush.msra.mxu0 0.0
    %128 = vmatpush.msra.mxu0 0.0
    %129 = vmatpush.msra.mxu0 %v111
    %130 = vmatpush.msra.mxu0 %v110
    %131 = vmatmul.f32.gmra.mxu0 %v113
    %v132 = vpop.f32.mrf.mxu0
    %v133 = vadd.f32 0.0, %v132
    %134 = vdwg.mxu0
    %v135 = vadd.f32 %v109, %v133
    %vm136 = vcmask 64512
    %137 = vst.msk [vmem:[#allocation2] sm:$0xff] %vm136, %v135
    // Predicated region
    $region22: #{tpu_custom_call.1} parent=1 // pred_check
      %p138 = pneg %p19
    $region23: #{tpu_custom_call.1} parent=1 // pred_check_branch
      %140 = sbr.rel (%p138) target = $region25
    $region24: #{tpu_custom_call.1} parent=1 // pred_region
      %v141 = vld [vmem:[#allocation2] sm:$0xff]
      %142 = vst.msk [vmem:[#allocation4] sm:$0xff] %vm136, %v141
    $region25: #{tpu_custom_call.1} parent=1 // pred_fallthru
      _
    // Predicated region
    $region26: #{tpu_custom_call.1} parent=1 // pred_check
      _
    $region27: #{tpu_custom_call.1} parent=1 // pred_check_branch
      %144 = sbr.rel (0) target = $region29
    $region28: #{tpu_custom_call.1} parent=1 // pred_region
      %146 = vsyncadd [#allocation5], 0
      %s148 = sshll.u32 [#allocation4], 4
      %s149 = int_to_ptr.vmem [resolvable:$true] %s148
      %s150 = sshll.u32 %s4, 4
      %s151 = int_to_ptr.hbm [resolvable:$true] %s150
      %153 = dma.vmem_to_hbm [thread:$0]  %s149, 128, %s151, [#allocation5]
    $region29: #{tpu_custom_call.1} parent=1 // pred_fallthru
      _
    // Predicated region
    $region30: #{tpu_custom_call.1} parent=1 // pred_check
      _
    $region31: #{tpu_custom_call.1} parent=1 // pred_check_branch
      %155 = sbr.rel (0) target = $region33
    $region32: #{tpu_custom_call.1} parent=1 // pred_region
      %157 = dma.done [#allocation5], 128
    $region33: #{tpu_custom_call.1} parent=1 // pred_fallthru
      _
    %158 = vsyncpa [#allocation5], 1

</llo_original>
